<compile_context>
chip_gen: v7x
topology: tpu7x:2x2x1
jax: 0.10.0
libtpu: 0.0.40
codegen_flags: <defaults>
</compile_context>

<pallas_src>
import math

import jax
import jax.numpy as jnp
from jax.experimental import pallas as pl
from jax.experimental.pallas import tpu as pltpu

_LANE = 128
_MAX_BLOCK_ROWS = 1024  # (1024, 128) f32 block = 512 KiB per stream buffer


def _laplace_entropy_kernel(x_ref, mean_ref, scale_ref, out_ref):
    x = x_ref[0]             # (TR, 128)
    mean = mean_ref[0, 0]    # (TR, 128)
    scale = scale_ref[0, 0]  # (TR, 128)

    # scale[scale == 0] = 1e-9
    scale = jnp.where(scale == 0.0, jnp.float32(1e-9), scale)
    inv_scale = 1.0 / scale  # exact divide (approx reciprocal too lossy at rtol=1e-5)

    # Laplace CDF: cdf(v) = 0.5 - 0.5*sign(v-mean)*expm1(-|v-mean|/scale)
    # The bin probability P = cdf(x+0.5) - cdf(x-0.5) depends only on
    # t = |x - mean|:
    #   a = (t + 0.5)/s,   b = |t - 0.5|/s
    #   t >= 0.5 :  P = 0.5*(exp(-b) - exp(-a))
    #   t <  0.5 :  P = -0.5*(expm1(-a) + expm1(-b))
    # Using T = tanh(-z/2)  =>  expm1(-z) = 2T/(1-T)  (exact identity), both
    # cases reduce to a single division and stay cancellation-free:
    #   t >= 0.5 :  P = (Tb - Ta)               / ((1-Ta)*(1-Tb))
    #   t <  0.5 :  P = (2*Ta*Tb - Ta - Tb)     / ((1-Ta)*(1-Tb))
    t = jnp.abs(x - mean)
    a = (t + 0.5) * inv_scale
    b = jnp.abs(t - 0.5) * inv_scale
    ta = jnp.tanh(-0.5 * a)
    tb = jnp.tanh(-0.5 * b)
    num = jnp.where(t < 0.5, 2.0 * ta * tb - ta - tb, tb - ta)
    p = num / ((1.0 - ta) * (1.0 - tb))

    # Low_bound forward == clamp(min=1e-6); P >= 0 so torch.abs is redundant.
    out_ref[0] = jnp.maximum(p, jnp.float32(1e-6))


def laplace_for_entropy(x, p_dec, *, block_rows=_MAX_BLOCK_ROWS):
    """x: (B, C, H, W); p_dec: (B, 2, C, H, W). Returns (B, C, H, W) float32."""
    assert p_dec.shape[0] == x.shape[0] and p_dec.shape[1] == 2
    assert p_dec.shape[2:] == x.shape[1:]

    orig_shape = x.shape
    B = x.shape[0]
    n = math.prod(x.shape[1:])  # elements per batch item (C*H*W)

    x = x.astype(jnp.float32)
    p = p_dec.astype(jnp.float32)

    # Lane-dense layout: (B, rows, 128) for x/out, (B, 2, rows, 128) for p_dec.
    # Reshapes are free (no HBM copy) when n % 128 == 0; otherwise pad the lane
    # axis minimally.
    pad = (-n) % _LANE
    n_pad = n + pad
    if pad:
        x2 = jnp.pad(x.reshape(B, n), ((0, 0), (0, pad)))
        p3 = jnp.pad(p.reshape(B, 2, n), ((0, 0), (0, 0), (0, pad)))
    else:
        x2 = x.reshape(B, n)
        p3 = p.reshape(B, 2, n)

    rows = n_pad // _LANE
    tr = block_rows if rows >= block_rows else rows  # full-extent block if small
    x3 = x2.reshape(B, rows, _LANE)
    p4 = p3.reshape(B, 2, rows, _LANE)

    x_spec = pl.BlockSpec((1, tr, _LANE), lambda b, r: (b, r, 0))
    mean_spec = pl.BlockSpec((1, 1, tr, _LANE), lambda b, r: (b, 0, r, 0))
    scale_spec = pl.BlockSpec((1, 1, tr, _LANE), lambda b, r: (b, 1, r, 0))

    out = pl.pallas_call(
        _laplace_entropy_kernel,
        out_shape=jax.ShapeDtypeStruct((B, rows, _LANE), jnp.float32),
        grid=(B, pl.cdiv(rows, tr)),
        in_specs=[x_spec, mean_spec, scale_spec],
        out_specs=x_spec,
        compiler_params=pltpu.CompilerParams(
            dimension_semantics=("parallel", "parallel")),
    )(x3, p4, p4)  # same p_dec buffer read by two specs (mean / scale)

    if pad:
        out = out.reshape(B, n_pad)[:, :n]
    return out.reshape(orig_shape)


def _reference(x, p_dec):
    """Faithful JAX port of the torch forward (uses true expm1)."""
    mean = p_dec[:, 0]
    scale = p_dec[:, 1]
    scale = jnp.where(scale == 0.0, 1e-9, scale)

    def cdf(v):
        d = v - mean
        return 0.5 - 0.5 * jnp.sign(d) * jnp.expm1(-jnp.abs(d) / scale)

    lik = jnp.abs(cdf(x + 0.5) - cdf(x - 0.5))
    return jnp.maximum(lik, 1e-6)


if __name__ == "__main__":
    key = jax.random.PRNGKey(0)
    B, C, H, W = 2, 4, 16, 16

    kx, km, ks = jax.random.split(key, 3)
    # Quantized-symbol-like input (integers), as typical for entropy models.
    x = jnp.round(jax.random.normal(kx, (B, C, H, W)) * 4.0).astype(jnp.float32)
    mean = jax.random.normal(km, (B, C, H, W)).astype(jnp.float32)
    scale = (jnp.abs(jax.random.normal(ks, (B, C, H, W))) + 0.1).astype(jnp.float32)
    scale = scale.at[0, 0, 0, 0].set(0.0)  # exercise the scale==0 fixup
    p_dec = jnp.stack([mean, scale], axis=1)  # (B, 2, C, H, W)

    out = jax.block_until_ready(laplace_for_entropy(x, p_dec))
    ref = _reference(x, p_dec)

    assert out.shape == (B, C, H, W)
    max_err = float(jnp.max(jnp.abs(out - ref)))
    assert jnp.allclose(out, ref, rtol=1e-5, atol=1e-6), max_err

    print("KERNEL_OK")
</pallas_src>

<mosaic_0001>
module attributes {stable_mosaic.version = 11 : i64} {
  func.func @_laplace_entropy_kernel(%arg0: i32, %arg1: i32, %arg2: memref<1x8x128xf32, #tpu.memory_space<vmem>>, %arg3: memref<1x1x8x128xf32, #tpu.memory_space<vmem>>, %arg4: memref<1x1x8x128xf32, #tpu.memory_space<vmem>>, %arg5: memref<1x8x128xf32, #tpu.memory_space<vmem>>) attributes {dimension_semantics = [#tpu.dimension_semantics<parallel>, #tpu.dimension_semantics<parallel>], iteration_bounds = array<i64: 2, 1>, scalar_prefetch = 0 : i64, scratch_operands = 0 : i64, tpu.core_type = #tpu.core_type<tc>, window_params = [{transform_indices = @transform_0, window_bounds = array<i64: 1, 8, 128>}, {transform_indices = @transform_1, window_bounds = array<i64: 1, 1, 8, 128>}, {transform_indices = @transform_2, window_bounds = array<i64: 1, 1, 8, 128>}, {transform_indices = @transform_3, window_bounds = array<i64: 1, 8, 128>}]} {
    %c0 = arith.constant 0 : index
    %c0_0 = arith.constant 0 : index
    %c0_1 = arith.constant 0 : index
    %0 = vector.load %arg2[%c0, %c0_0, %c0_1] : memref<1x8x128xf32, #tpu.memory_space<vmem>>, vector<1x8x128xf32>
    %1 = vector.shape_cast %0 : vector<1x8x128xf32> to vector<8x128xf32>
    %c0_2 = arith.constant 0 : index
    %c0_3 = arith.constant 0 : index
    %c0_4 = arith.constant 0 : index
    %c0_5 = arith.constant 0 : index
    %2 = vector.load %arg3[%c0_2, %c0_3, %c0_4, %c0_5] : memref<1x1x8x128xf32, #tpu.memory_space<vmem>>, vector<1x1x8x128xf32>
    %3 = vector.shape_cast %2 : vector<1x1x8x128xf32> to vector<8x128xf32>
    %c0_6 = arith.constant 0 : index
    %c0_7 = arith.constant 0 : index
    %c0_8 = arith.constant 0 : index
    %c0_9 = arith.constant 0 : index
    %4 = vector.load %arg4[%c0_6, %c0_7, %c0_8, %c0_9] : memref<1x1x8x128xf32, #tpu.memory_space<vmem>>, vector<1x1x8x128xf32>
    %5 = vector.shape_cast %4 : vector<1x1x8x128xf32> to vector<8x128xf32>
    %cst = arith.constant 0.000000e+00 : f32
    %6 = vector.broadcast %cst : f32 to vector<8x128xf32>
    %7 = arith.cmpf oeq, %5, %6 : vector<8x128xf32>
    %cst_10 = arith.constant 9.99999971E-10 : f32
    %8 = vector.broadcast %cst_10 : f32 to vector<8x128xf32>
    %9 = arith.select %7, %8, %5 : vector<8x128xi1>, vector<8x128xf32>
    %cst_11 = arith.constant 1.000000e+00 : f32
    %10 = vector.broadcast %cst_11 : f32 to vector<8x128xf32>
    %11 = arith.divf %10, %9 : vector<8x128xf32>
    %12 = arith.subf %1, %3 : vector<8x128xf32>
    %13 = math.absf %12 : vector<8x128xf32>
    %cst_12 = arith.constant 5.000000e-01 : f32
    %14 = vector.broadcast %cst_12 : f32 to vector<8x128xf32>
    %15 = arith.addf %13, %14 : vector<8x128xf32>
    %16 = arith.mulf %15, %11 : vector<8x128xf32>
    %cst_13 = arith.constant 5.000000e-01 : f32
    %17 = vector.broadcast %cst_13 : f32 to vector<8x128xf32>
    %18 = arith.subf %13, %17 : vector<8x128xf32>
    %19 = math.absf %18 : vector<8x128xf32>
    %20 = arith.mulf %19, %11 : vector<8x128xf32>
    %cst_14 = arith.constant -5.000000e-01 : f32
    %21 = vector.broadcast %cst_14 : f32 to vector<8x128xf32>
    %22 = arith.mulf %21, %16 : vector<8x128xf32>
    %23 = math.tanh %22 : vector<8x128xf32>
    %cst_15 = arith.constant -5.000000e-01 : f32
    %24 = vector.broadcast %cst_15 : f32 to vector<8x128xf32>
    %25 = arith.mulf %24, %20 : vector<8x128xf32>
    %26 = math.tanh %25 : vector<8x128xf32>
    %cst_16 = arith.constant 5.000000e-01 : f32
    %27 = vector.broadcast %cst_16 : f32 to vector<8x128xf32>
    %28 = arith.cmpf olt, %13, %27 : vector<8x128xf32>
    %cst_17 = arith.constant 2.000000e+00 : f32
    %29 = vector.broadcast %cst_17 : f32 to vector<8x128xf32>
    %30 = arith.mulf %29, %23 : vector<8x128xf32>
    %31 = arith.mulf %30, %26 : vector<8x128xf32>
    %32 = arith.subf %31, %23 : vector<8x128xf32>
    %33 = arith.subf %32, %26 : vector<8x128xf32>
    %34 = arith.subf %26, %23 : vector<8x128xf32>
    %35 = arith.select %28, %33, %34 : vector<8x128xi1>, vector<8x128xf32>
    %cst_18 = arith.constant 1.000000e+00 : f32
    %36 = vector.broadcast %cst_18 : f32 to vector<8x128xf32>
    %37 = arith.subf %36, %23 : vector<8x128xf32>
    %cst_19 = arith.constant 1.000000e+00 : f32
    %38 = vector.broadcast %cst_19 : f32 to vector<8x128xf32>
    %39 = arith.subf %38, %26 : vector<8x128xf32>
    %40 = arith.mulf %37, %39 : vector<8x128xf32>
    %41 = arith.divf %35, %40 : vector<8x128xf32>
    %cst_20 = arith.constant 9.99999997E-7 : f32
    %42 = vector.broadcast %cst_20 : f32 to vector<8x128xf32>
    %43 = arith.maximumf %41, %42 : vector<8x128xf32>
    %c0_21 = arith.constant 0 : index
    %c0_22 = arith.constant 0 : index
    %c0_23 = arith.constant 0 : index
    %44 = vector.load %arg5[%c0_21, %c0_22, %c0_23] : memref<1x8x128xf32, #tpu.memory_space<vmem>>, vector<1x8x128xf32>
    %45 = vector.shape_cast %44 : vector<1x8x128xf32> to vector<8x128xf32>
    %46 = vector.shape_cast %43 : vector<8x128xf32> to vector<1x8x128xf32>
    tpu.vector_store %arg5[%c0_21, %c0_22, %c0_23], %46 {strides = array<i32>} : memref<1x8x128xf32, #tpu.memory_space<vmem>>, vector<1x8x128xf32>,
    return
  }
  func.func @transform_0(%arg0: i32, %arg1: i32) -> (i32, i32, i32) {
    %c0_i32 = arith.constant 0 : i32
    %c0_i32_0 = arith.constant 0 : i32
    return %arg0, %arg1, %c0_i32 : i32, i32, i32
  }
  func.func @transform_1(%arg0: i32, %arg1: i32) -> (i32, i32, i32, i32) {
    %c0_i32 = arith.constant 0 : i32
    %c0_i32_0 = arith.constant 0 : i32
    %c0_i32_1 = arith.constant 0 : i32
    return %arg0, %c0_i32, %arg1, %c0_i32_0 : i32, i32, i32, i32
  }
  func.func @transform_2(%arg0: i32, %arg1: i32) -> (i32, i32, i32, i32) {
    %c1_i32 = arith.constant 1 : i32
    %c0_i32 = arith.constant 0 : i32
    %c0_i32_0 = arith.constant 0 : i32
    return %arg0, %c1_i32, %arg1, %c0_i32 : i32, i32, i32, i32
  }
  func.func @transform_3(%arg0: i32, %arg1: i32) -> (i32, i32, i32) {
    %c0_i32 = arith.constant 0 : i32
    %c0_i32_0 = arith.constant 0 : i32
    return %arg0, %arg1, %c0_i32 : i32, i32, i32
  }
}

</mosaic_0001>

<llo_original>
// kernel: tpu_custom_call.1
$region0: #{tpu_custom_call.1}
  #allocation0 [shape = 'u32[]', space=smem, size = 0x4, offset = 0x4, fixed_abs, tag = 'smem constant byte address 0x4 - core index']
  #allocation1 [shape = 'u32[144,128]{1,0:T(1,128)}', space=vmem, size = 0x12000, scoped, tag = 'internal scratch']
  %s0 = inlined_call_operand.hbm [shape: f32[2,8,128], index: 0, kind: input, shape index: {}]
  %s1 = inlined_call_operand.hbm [shape: f32[2,2,8,128], index: 1, kind: input, shape index: {}]
  %s2 = inlined_call_operand.hbm [shape: f32[2,2,8,128], index: 2, kind: input, shape index: {}]
  %s3 = inlined_call_operand.hbm [shape: f32[2,8,128], index: 3, kind: output, shape index: {}]
  %s4 = sld [smem:[#allocation0]]
  $region57: #{tpu_custom_call.1} parent=0
    _
  %s6 = ssub.s32 1, %s4
  %s7 = scalar_select 0, %s6, %s4
  $region1: #{tpu_custom_call.1} parent=0
    #allocation2 [shape = 'u8[8192]{0}', space=vmem, size = 0x2000, scoped, tag = 'input window, operand 0']
    #allocation3 [shape = 's32[2]{0}', space=sflag, size = 0x8, scoped, tag = 'scoped memory for tpu_custom_call.1']
    #allocation4 [shape = 's32[2]{0}', space=sflag, size = 0x8, scoped, tag = 'scoped memory for tpu_custom_call.1']
    #allocation5 [shape = 'u8[8192]{0}', space=vmem, size = 0x2000, scoped, tag = 'input window, operand 1']
    #allocation6 [shape = 's32[2]{0}', space=sflag, size = 0x8, scoped, tag = 'scoped memory for tpu_custom_call.1']
    #allocation7 [shape = 'u8[8192]{0}', space=vmem, size = 0x2000, scoped, tag = 'input window, operand 2']
    #allocation8 [shape = 'u8[8192]{0}', space=vmem, size = 0x2000, scoped, tag = 'output window, operand 0']
    %8 = vsyncpa [#allocation3], 0
    %s9 = scalar_lea.sflag [#allocation3], 1
    %10 = vsyncpa %s9, 0
    %11 = vsyncpa [#allocation6], 0
    %s12 = scalar_lea.sflag [#allocation6], 1
    %13 = vsyncpa %s12, 0
    %14 = vsyncpa [#allocation4], 0
    %s15 = scalar_lea.sflag [#allocation4], 1
    %16 = vsyncpa %s15, 0
    loop: start=0, step=1, limit=4
    $region2: #{tpu_custom_call.1} parent=1 // loop_pre_header
      _
    $region3: #{tpu_custom_call.1} parent=1 // loop_header
      %s18 = sphi 0, %s22
      %p19 = scmp.ge.s32.totalorder %s18, 4
      %s25 = sphi 0, %s37
      %s26 = sphi 0, %s33
      %s27 = sphi 0, %s25
      %s28 = sphi 0, %s26
      %s29 = sphi 0, %s27
      %s30 = sphi 0, %s28
      %s42 = sphi 0, %s44
      %s45 = sphi 0, %s42
      %s46 = sphi 0, %s45
      %s62 = sphi 0, %s46
      %s70 = sphi 0, %s72
      %s73 = sphi 0, %s70
      %s74 = sphi 0, %s73
      %s90 = sphi 0, %s74
      %s98 = sphi 0, %s100
      %s101 = sphi 0, %s98
      %s102 = sphi 0, %s101
      %s118 = sphi 0, %s102
      %s126 = sphi 0, %s128
      %s129 = sphi 0, %s126
      %s130 = sphi 0, %s129
      %s146 = sphi 0, %s130
    $region4: #{tpu_custom_call.1} parent=1 // loop_header_branch
      %21 = sbr.rel (%p19) target = $region8
    $region5: #{tpu_custom_call.1} parent=1 // loop_body
      %s23 = ssub.s32 %s18, 1
      %s24 = ssub.s32 %s18, 2
      %s31 = sadd.s32 1, %s26
      %p32 = scmp.ge.s32.totalorder %s31, 1
      %s33 = scalar_select %p32, 0, %s31
      %s34 = sadd.s32 1, %s25
      %s35 = scalar_select %p32, %s34, %s25
      %p36 = scmp.ge.s32.totalorder %s35, 2
      %s37 = scalar_select %p36, 0, %s35
      %s38 = ssub.s32 %s25, %s37
      %s39 = ssub.s32 %s26, %s33
      %s40 = sor.u32 %s38, %s39
      %p41 = scmp.eq.s32.totalorder %s40, 0
      %s43 = sadd.s32 %s42, 1
      %s44 = scalar_select %p41, %s42, %s43
      %p47 = pneg %p41
      %p48 = scmp.eq.s32.totalorder %s18, 1
      %p49 = por %p47, %p48
      %p50 = scmp.ne.s32.totalorder %s42, %s45
      %p51 = scmp.eq.s32.totalorder %s18, 0
      %p52 = por %p50, %p51
      %p53 = scmp.ne.s32.totalorder %s42, %s45
      %p54 = scmp.eq.s32.totalorder %s23, 1
      %p55 = por %p53, %p54
      %p56 = scmp.ne.s32.totalorder %s45, %s46
      %p57 = scmp.eq.s32.totalorder %s23, 0
      %p58 = por %p56, %p57
      %p59 = scmp.ne.s32.totalorder %s45, %s46
      %p60 = scmp.eq.s32.totalorder %s24, 1
      %p61 = por %p59, %p60
      %p63 = scmp.ne.s32.totalorder %s46, %s62
      %p64 = scmp.eq.s32.totalorder %s24, 0
      %p65 = por %p63, %p64
      %s66 = ssub.s32 %s25, %s37
      %s67 = ssub.s32 %s26, %s33
      %s68 = sor.u32 %s66, %s67
      %p69 = scmp.eq.s32.totalorder %s68, 0
      %s71 = sadd.s32 %s70, 1
      %s72 = scalar_select %p69, %s70, %s71
      %p75 = pneg %p69
      %p76 = scmp.eq.s32.totalorder %s18, 1
      %p77 = por %p75, %p76
      %p78 = scmp.ne.s32.totalorder %s70, %s73
      %p79 = scmp.eq.s32.totalorder %s18, 0
      %p80 = por %p78, %p79
      %p81 = scmp.ne.s32.totalorder %s70, %s73
      %p82 = scmp.eq.s32.totalorder %s23, 1
      %p83 = por %p81, %p82
      %p84 = scmp.ne.s32.totalorder %s73, %s74
      %p85 = scmp.eq.s32.totalorder %s23, 0
      %p86 = por %p84, %p85
      %p87 = scmp.ne.s32.totalorder %s73, %s74
      %p88 = scmp.eq.s32.totalorder %s24, 1
      %p89 = por %p87, %p88
      %p91 = scmp.ne.s32.totalorder %s74, %s90
      %p92 = scmp.eq.s32.totalorder %s24, 0
      %p93 = por %p91, %p92
      %s94 = ssub.s32 %s25, %s37
      %s95 = ssub.s32 %s26, %s33
      %s96 = sor.u32 %s94, %s95
      %p97 = scmp.eq.s32.totalorder %s96, 0
      %s99 = sadd.s32 %s98, 1
      %s100 = scalar_select %p97, %s98, %s99
      %p103 = pneg %p97
      %p104 = scmp.eq.s32.totalorder %s18, 1
      %p105 = por %p103, %p104
      %p106 = scmp.ne.s32.totalorder %s98, %s101
      %p107 = scmp.eq.s32.totalorder %s18, 0
      %p108 = por %p106, %p107
      %p109 = scmp.ne.s32.totalorder %s98, %s101
      %p110 = scmp.eq.s32.totalorder %s23, 1
      %p111 = por %p109, %p110
      %p112 = scmp.ne.s32.totalorder %s101, %s102
      %p113 = scmp.eq.s32.totalorder %s23, 0
      %p114 = por %p112, %p113
      %p115 = scmp.ne.s32.totalorder %s101, %s102
      %p116 = scmp.eq.s32.totalorder %s24, 1
      %p117 = por %p115, %p116
      %p119 = scmp.ne.s32.totalorder %s102, %s118
      %p120 = scmp.eq.s32.totalorder %s24, 0
      %p121 = por %p119, %p120
      %s122 = ssub.s32 %s25, %s37
      %s123 = ssub.s32 %s26, %s33
      %s124 = sor.u32 %s122, %s123
      %p125 = scmp.eq.s32.totalorder %s124, 0
      %s127 = sadd.s32 %s126, 1
      %s128 = scalar_select %p125, %s126, %s127
      %p131 = pneg %p125
      %p132 = scmp.eq.s32.totalorder %s18, 1
      %p133 = por %p131, %p132
      %p134 = scmp.ne.s32.totalorder %s126, %s129
      %p135 = scmp.eq.s32.totalorder %s18, 0
      %p136 = por %p134, %p135
      %p137 = scmp.ne.s32.totalorder %s126, %s129
      %p138 = scmp.eq.s32.totalorder %s23, 1
      %p139 = por %p137, %p138
      %p140 = scmp.ne.s32.totalorder %s129, %s130
      %p141 = scmp.eq.s32.totalorder %s23, 0
      %p142 = por %p140, %p141
      %p143 = scmp.ne.s32.totalorder %s129, %s130
      %p144 = scmp.eq.s32.totalorder %s24, 1
      %p145 = por %p143, %p144
      %p147 = scmp.ne.s32.totalorder %s130, %s146
      %p148 = scmp.eq.s32.totalorder %s24, 0
      %p149 = por %p147, %p148
      %p150 = scmp.le.s32.totalorder 1, %s18
      %p151 = scmp.lt.s32.totalorder %s18, 3
      %p152 = pnand %p150, %p151
      %p153 = pneg %p152
      // Predicated region
      $region9: #{tpu_custom_call.1} parent=5 // pred_check
        _
      $region10: #{tpu_custom_call.1} parent=5 // pred_check_branch
        %155 = sbr.rel (%p152) target = $region12
      $region11: #{tpu_custom_call.1} parent=5 // pred_region
        %s156 = ssub.s32 %s18, 1
      $region12: #{tpu_custom_call.1} parent=5 // pred_fallthru
        _
      %p157 = scmp.lt.s32.totalorder %s18, 2
      // Predicated region
      $region13: #{tpu_custom_call.1} parent=5 // pred_check
        %p158 = pneg %p157
      $region14: #{tpu_custom_call.1} parent=5 // pred_check_branch
        %160 = sbr.rel (%p158) target = $region16
      $region15: #{tpu_custom_call.1} parent=5 // pred_region
        // Predicated region
        $region17: #{tpu_custom_call.1} parent=15 // pred_check
          %p161 = pneg %p52
        $region18: #{tpu_custom_call.1} parent=15 // pred_check_branch
          %163 = sbr.rel (%p161) target = $region20
        $region19: #{tpu_custom_call.1} parent=15 // pred_region
          %s164 = sand.u32 %s42, 1
          %s165 = scalar_lea.sflag [#allocation3], %s164
          %s166 = sand.u32 %s42, 1
          %s167 = smul.addr %s166, 8
          %s168 = scalar_lea.vmem [#allocation2], %s167
          %s170 = ssub.s32 128, 128
          %171 = vsyncadd %s165, %s170
          %s172 = sadd.s32 %s26, %s25
          %s173 = smul.addr %s172, 128
          %s174 = scalar_lea.hbm %s0, %s173
          %s176 = sshll.u32 %s168, 4
          %s177 = int_to_ptr.vmem [resolvable:$true] %s176
          %179 = dma.hbm_to_vmem [thread:$0]  %s174, 128, %s177, %s165
        $region20: #{tpu_custom_call.1} parent=15 // pred_fallthru
          _
        // Predicated region
        $region21: #{tpu_custom_call.1} parent=15 // pred_check
          %p180 = pneg %p80
        $region22: #{tpu_custom_call.1} parent=15 // pred_check_branch
          %182 = sbr.rel (%p180) target = $region24
        $region23: #{tpu_custom_call.1} parent=15 // pred_region
          %s183 = sand.u32 %s18, 1
          %s184 = scalar_lea.sflag [#allocation6], %s183
          %s185 = sand.u32 %s70, 1
          %s186 = smul.addr %s185, 8
          %s187 = scalar_lea.vmem [#allocation5], %s186
          %s189 = ssub.s32 128, 128
          %190 = vsyncadd %s184, %s189
          %s191 = smul.addr %s25, 2
          %s192 = sadd.s32 %s26, %s191
          %s193 = smul.addr %s192, 128
          %s194 = scalar_lea.hbm %s1, %s193
          %s196 = sshll.u32 %s187, 4
          %s197 = int_to_ptr.vmem [resolvable:$true] %s196
          %199 = dma.hbm_to_vmem [thread:$0]  %s194, 128, %s197, %s184
        $region24: #{tpu_custom_call.1} parent=15 // pred_fallthru
          _
        // Predicated region
        $region25: #{tpu_custom_call.1} parent=15 // pred_check
          %p200 = pneg %p108
        $region26: #{tpu_custom_call.1} parent=15 // pred_check_branch
          %202 = sbr.rel (%p200) target = $region28
        $region27: #{tpu_custom_call.1} parent=15 // pred_region
          %s203 = sand.u32 %s18, 1
          %s204 = scalar_lea.sflag [#allocation6], %s203
          %s205 = sand.u32 %s98, 1
          %s206 = smul.addr %s205, 8
          %s207 = scalar_lea.vmem [#allocation7], %s206
          %s209 = ssub.s32 128, 128
          %210 = vsyncadd %s204, %s209
          %s211 = sadd.s32 %s26, 1
          %s212 = smul.addr %s25, 2
          %s213 = sadd.s32 %s211, %s212
          %s214 = smul.addr %s213, 128
          %s215 = scalar_lea.hbm %s2, %s214
          %s217 = sshll.u32 %s207, 4
          %s218 = int_to_ptr.vmem [resolvable:$true] %s217
          %220 = dma.hbm_to_vmem [thread:$0]  %s215, 128, %s218, %s204
        $region28: #{tpu_custom_call.1} parent=15 // pred_fallthru
          _
      $region16: #{tpu_custom_call.1} parent=5 // pred_fallthru
        _
      %p221 = scmp.le.s32.totalorder 1, %s18
      %p222 = scmp.lt.s32.totalorder %s18, 3
      %p223 = pnand %p221, %p222
      %p224 = pneg %p223
      // Predicated region
      $region29: #{tpu_custom_call.1} parent=5 // pred_check
        _
      $region30: #{tpu_custom_call.1} parent=5 // pred_check_branch
        %226 = sbr.rel (%p223) target = $region32
      $region31: #{tpu_custom_call.1} parent=5 // pred_region
        %s227 = ssub.s32 %s18, 1
        %s228 = sand.u32 %s45, 1
        %s229 = scalar_lea.sflag [#allocation3], %s228
        %s230 = sand.u32 %s45, 1
        %s231 = smul.addr %s230, 8
        %s232 = scalar_lea.vmem [#allocation2], %s231
        // Predicated region
        $region33: #{tpu_custom_call.1} parent=31 // pred_check
          %p233 = pneg %p58
        $region34: #{tpu_custom_call.1} parent=31 // pred_check_branch
          %235 = sbr.rel (%p233) target = $region36
        $region35: #{tpu_custom_call.1} parent=31 // pred_region
          %236 = dma.done %s229, 128
        $region36: #{tpu_custom_call.1} parent=31 // pred_fallthru
          _
        %s237 = sand.u32 %s23, 1
        %s238 = scalar_lea.sflag [#allocation6], %s237
        %s239 = sand.u32 %s73, 1
        %s240 = smul.addr %s239, 8
        %s241 = scalar_lea.vmem [#allocation5], %s240
        // Predicated region
        $region37: #{tpu_custom_call.1} parent=31 // pred_check
          %p242 = pneg %p86
        $region38: #{tpu_custom_call.1} parent=31 // pred_check_branch
          %244 = sbr.rel (%p242) target = $region40
        $region39: #{tpu_custom_call.1} parent=31 // pred_region
          %245 = dma.done %s238, 128
        $region40: #{tpu_custom_call.1} parent=31 // pred_fallthru
          _
        %s246 = sand.u32 %s23, 1
        %s247 = scalar_lea.sflag [#allocation6], %s246
        %s248 = sand.u32 %s101, 1
        %s249 = smul.addr %s248, 8
        %s250 = scalar_lea.vmem [#allocation7], %s249
        // Predicated region
        $region41: #{tpu_custom_call.1} parent=31 // pred_check
          %p251 = pneg %p114
        $region42: #{tpu_custom_call.1} parent=31 // pred_check_branch
          %253 = sbr.rel (%p251) target = $region44
        $region43: #{tpu_custom_call.1} parent=31 // pred_region
          %254 = dma.done %s247, 128
        $region44: #{tpu_custom_call.1} parent=31 // pred_fallthru
          _
        %s255 = sand.u32 %s45, 1
        %s256 = scalar_lea.sflag [#allocation3], %s255
        %s257 = sand.u32 %s45, 1
        %s258 = smul.addr %s257, 8
        %s259 = scalar_lea.vmem [#allocation2], %s258
        %p260 = pneg %p58
        %p261 = pneg %p55
        %s262 = sand.u32 %s23, 1
        %s263 = scalar_lea.sflag [#allocation6], %s262
        %s264 = sand.u32 %s73, 1
        %s265 = smul.addr %s264, 8
        %s266 = scalar_lea.vmem [#allocation5], %s265
        %p267 = pneg %p86
        %p268 = pneg %p83
        %s269 = sand.u32 %s23, 1
        %s270 = scalar_lea.sflag [#allocation6], %s269
        %s271 = sand.u32 %s101, 1
        %s272 = smul.addr %s271, 8
        %s273 = scalar_lea.vmem [#allocation7], %s272
        %p274 = pneg %p114
        %p275 = pneg %p111
        %p276 = pneg %p142
        %p277 = pneg %p139
        %s278 = sand.u32 %s129, 1
        %s279 = scalar_lea.sflag [#allocation4], %s278
        %s280 = sand.u32 %s129, 1
        %s281 = smul.addr %s280, 8
        %s282 = scalar_lea.vmem [#allocation8], %s281
        %v283 = vld [vmem:[%s232] sm:$0xff]
        %v284 = vld [vmem:[%s241] sm:$0xff]
        %v285 = vld [vmem:[%s250] sm:$0xff]
        %vm286 = vcmp.eq.f32.partialorder %v285, 0.0
        %v287 = vsel %vm286, 1e-09, %v285
        %v288 = vrcp.pop %v287
        %v289 = vmul.f32 1.0, %v288
        %v290 = vsub.f32 %v283, %v284
        %v291 = vand.u32 2147483647, %v290
        %v292 = vadd.f32 %v291, 0.5
        %v293 = vmul.f32 %v292, %v289
        %v294 = vsub.f32 %v291, 0.5
        %v295 = vand.u32 2147483647, %v294
        %v296 = vmul.f32 %v295, %v289
        %v297 = vmul.f32 %v293, -0.5
        %v298 = vtanh.pop %v297
        %v299 = vmul.f32 %v296, -0.5
        %v300 = vtanh.pop %v299
        %vm301 = vcmp.lt.f32.partialorder %v291, 0.5
        %v302 = vmul.f32 %v298, 2.0
        %v303 = vmul.f32 %v302, %v300
        %v304 = vsub.f32 %v303, %v298
        %v305 = vsub.f32 %v304, %v300
        %v306 = vsub.f32 %v300, %v298
        %v307 = vsel %vm301, %v305, %v306
        %v308 = vsub.f32 1.0, %v298
        %v309 = vsub.f32 1.0, %v300
        %v310 = vmul.f32 %v308, %v309
        %v311 = vrcp.pop %v310
        %v312 = vmul.f32 %v307, %v311
        %v313 = vmax.f32 %v312, 1e-06
        %314 = vst [vmem:[%s282] sm:$0xff] %v313
        %s315 = sand.u32 %s129, 1
        %s316 = scalar_lea.sflag [#allocation4], %s315
        %s317 = sand.u32 %s129, 1
        %s318 = smul.addr %s317, 8
        %s319 = scalar_lea.vmem [#allocation8], %s318
        // Predicated region
        $region45: #{tpu_custom_call.1} parent=31 // pred_check
          %p320 = pneg %p139
        $region46: #{tpu_custom_call.1} parent=31 // pred_check_branch
          %322 = sbr.rel (%p320) target = $region48
        $region47: #{tpu_custom_call.1} parent=31 // pred_region
          %s324 = ssub.s32 128, 128
          %325 = vsyncadd %s316, %s324
          %s326 = sadd.s32 %s28, %s27
          %s327 = smul.addr %s326, 128
          %s328 = scalar_lea.hbm %s3, %s327
          %s330 = sshll.u32 %s319, 4
          %s331 = int_to_ptr.vmem [resolvable:$true] %s330
          %333 = dma.vmem_to_hbm [thread:$0]  %s331, 128, %s328, %s316
        $region48: #{tpu_custom_call.1} parent=31 // pred_fallthru
          _
      $region32: #{tpu_custom_call.1} parent=5 // pred_fallthru
        _
      %p334 = scmp.le.s32.totalorder 2, %s18
      // Predicated region
      $region49: #{tpu_custom_call.1} parent=5 // pred_check
        %p335 = pneg %p334
      $region50: #{tpu_custom_call.1} parent=5 // pred_check_branch
        %337 = sbr.rel (%p335) target = $region52
      $region51: #{tpu_custom_call.1} parent=5 // pred_region
        %s338 = ssub.s32 %s18, 2
        // Predicated region
        $region53: #{tpu_custom_call.1} parent=51 // pred_check
          %p339 = pneg %p145
        $region54: #{tpu_custom_call.1} parent=51 // pred_check_branch
          %341 = sbr.rel (%p339) target = $region56
        $region55: #{tpu_custom_call.1} parent=51 // pred_region
          %s342 = sand.u32 %s130, 1
          %s343 = scalar_lea.sflag [#allocation4], %s342
          %s344 = sand.u32 %s130, 1
          %s345 = smul.addr %s344, 8
          %s346 = scalar_lea.vmem [#allocation8], %s345
          %347 = dma.done %s343, 128
        $region56: #{tpu_custom_call.1} parent=51 // pred_fallthru
          _
      $region52: #{tpu_custom_call.1} parent=5 // pred_fallthru
        _
    $region6: #{tpu_custom_call.1} parent=1 // loop_footer
      %s22 = sadd.s32 1, %s18
    $region7: #{tpu_custom_call.1} parent=1 // loop_footer_branch
      %17 = sbr.rel target = $region3
    $region8: #{tpu_custom_call.1} parent=1 // loop_exit
      _
    %348 = vsyncpa [#allocation3], 1
    %s349 = scalar_lea.sflag [#allocation3], 1
    %350 = vsyncpa %s349, 1
    %351 = vsyncpa [#allocation6], 1
    %s352 = scalar_lea.sflag [#allocation6], 1
    %353 = vsyncpa %s352, 1
    %354 = vsyncpa [#allocation4], 1
    %s355 = scalar_lea.sflag [#allocation4], 1
    %356 = vsyncpa %s355, 1

</llo_original>
